<compile_context>
chip_gen: v7x
topology: tpu7x:2x2x1
jax: 0.10.0
libtpu: 0.0.40
codegen_flags: <defaults>
</compile_context>

<pallas_src>
import functools
import math

import jax
import jax.numpy as jnp
from jax import lax
from jax.experimental import pallas as pl
from jax.experimental.pallas import tpu as pltpu

_LANES = 128
_SUBLANES = 8
_HALF_LOG_2PI = 0.5 * math.log(2.0 * math.pi)


def _round_up(n, m):
    return ((n + m - 1) // m) * m


def actor_critic_kernel(
    in_ref,       # (TB, 128) f32  packed slab: eps|eps|1|x (see wrapper)
    w1_ref,       # (128, Hp)      layer-1 weight (b1 folded into the 1-lane row)
    w2_ref,       # (Hp, Hp)
    wh_ref,       # (Hp, 128)      fused head: lanes [0,A)=mu, lane 2A=value
    consts_ref,   # (8, Hp) f32    row0=b2, row1=head bias, row2=std, row3=lp bias
    out_ref,      # (TB, 128) f32  packed output slab
    *, action_dim,
):
    A = action_dim

    slab = in_ref[...]                                   # f32, exact eps / x
    consts = consts_ref[...]
    b2 = consts[0:1, :]
    bh = consts[1:2, :_LANES]
    std = consts[2:3, :_LANES]
    nlpb = consts[3:4, :_LANES]

    # ---- MLP trunk (b1 folded into w1 via the constant-1 lane) ----
    h = jnp.dot(slab.astype(w1_ref.dtype), w1_ref[...],
                preferred_element_type=jnp.float32)
    h = jnp.maximum(h, 0.0)
    h = jnp.dot(h.astype(w2_ref.dtype), w2_ref[...],
                preferred_element_type=jnp.float32) + b2
    h = jnp.maximum(h, 0.0)

    # ---- fused actor-mu + critic head: one MXU push instead of two narrow ones
    head = jnp.dot(h.astype(wh_ref.dtype), wh_ref[...],
                   preferred_element_type=jnp.float32) + bh
    # head lanes: [0,A) = mu, lane 2A = state value, rest ~0.

    # rsample + tanh squash (valid in lanes [0,A); slab holds eps there)
    action = jnp.tanh(head + std * slab)
    # Normal(mu,std).log_prob(mu + std*eps) == -0.5*eps^2 - log_std - 0.5*log(2pi)
    # (exact algebraic simplification; valid in lanes [A,2A))
    log_prob = -0.5 * slab * slab + nlpb

    lane = lax.broadcasted_iota(jnp.int32, head.shape, 1)
    out_ref[...] = jnp.where(
        lane < A, action,
        jnp.where(lane < 2 * A, log_prob,
                  jnp.where(lane == 2 * A, head, 0.0)))


def actor_critic_forward(x, params, eps, *, block_batch=256,
                         matmul_dtype=jnp.float32):
    """x: (B, F) float32; eps: (B, A) float32 standard-normal noise.

    Returns (action (B,A), state_value (B,1), log_prob (B,A)).
    Set matmul_dtype=jnp.bfloat16 on v6e/v7x for fewer MXU passes
    (accumulation stays f32; relax tolerances accordingly).
    """
    f32 = jnp.float32
    x = jnp.asarray(x, f32)
    eps = jnp.asarray(eps, f32)
    B, F = x.shape
    H = params["w1"].shape[1]
    A = params["w_mu"].shape[1]
    Hp = _round_up(H, _LANES)

    ONE_LANE = 2 * A           # constant-1 lane (bias folding); also value out lane
    X_OFF = 2 * A + 1          # feature lanes start
    assert X_OFF + F <= _LANES, "action_dim/input_dim too large for one 128-lane slab"

    # ---- lane-dense parameter layout (pure layout plumbing, done once) ----
    w1big = (jnp.zeros((_LANES, Hp), f32)
             .at[X_OFF:X_OFF + F, :H].set(params["w1"])
             .at[ONE_LANE, :H].set(params["b1"].reshape(-1)))
    w2p = jnp.zeros((Hp, Hp), f32).at[:H, :H].set(params["w2"])
    whp = (jnp.zeros((Hp, _LANES), f32)
           .at[:H, :A].set(params["w_mu"])
           .at[:H, 2 * A].set(params["w_c"][:, 0]))

    log_std = params["log_std"].reshape(1, A).astype(f32)
    consts = (jnp.zeros((_SUBLANES, Hp), f32)
              .at[0, :H].set(params["b2"].reshape(-1))                       # b2
              .at[1, :A].set(params["b_mu"].reshape(-1))                     # head bias
              .at[1, 2 * A].set(params["b_c"].reshape(-1)[0])
              .at[2, :A].set(jnp.exp(log_std[0]))                            # std
              .at[3, A:2 * A].set(-(log_std[0] + _HALF_LOG_2PI)))            # lp bias

    w1big = w1big.astype(matmul_dtype)
    w2p = w2p.astype(matmul_dtype)
    whp = whp.astype(matmul_dtype)

    # ---- batch tiling (parallel grid => both v7x TensorCores used) ----
    TB = min(_round_up(block_batch, _SUBLANES), _round_up(B, _SUBLANES))
    BP = _round_up(B, TB)

    # Packed input slab: eps | eps | 1 | x  (kept f32 so eps/x stay exact).
    slab = (jnp.zeros((BP, _LANES), f32)
            .at[:B, :A].set(eps)
            .at[:B, A:2 * A].set(eps)
            .at[:B, ONE_LANE].set(1.0)
            .at[:B, X_OFF:X_OFF + F].set(x))

    grid = (BP // TB,)
    kernel = functools.partial(actor_critic_kernel, action_dim=A)

    def resident(shape):
        return pl.BlockSpec(shape, lambda i: (0, 0))

    out = pl.pallas_call(
        kernel,
        out_shape=jax.ShapeDtypeStruct((BP, _LANES), jnp.float32),
        grid=grid,
        in_specs=[
            pl.BlockSpec((TB, _LANES), lambda i: (i, 0)),   # packed input tile
            resident((_LANES, Hp)),                         # layer 1 (+b1 folded)
            resident((Hp, Hp)),                             # layer 2
            resident((Hp, _LANES)),                         # fused head
            resident((_SUBLANES, Hp)),                      # packed constants
        ],
        out_specs=pl.BlockSpec((TB, _LANES), lambda i: (i, 0)),
        compiler_params=pltpu.CompilerParams(
            dimension_semantics=("parallel",)),
    )(slab, w1big, w2p, whp, consts)

    action = out[:B, :A]
    log_prob = out[:B, A:2 * A]
    value = out[:B, 2 * A:2 * A + 1]
    return action, value, log_prob


def init_params(key, input_dim, hidden_dim, action_dim, init_std=0.02):
    """Mirrors ActorCritic.init_weights: weights ~ N(0, init_std), biases = 0.

    Weights stored transposed vs. PyTorch, i.e. (in, out), so the kernel
    computes x @ W + b.
    """
    k1, k2, k3, k4 = jax.random.split(key, 4)
    return {
        "w1": init_std * jax.random.normal(k1, (input_dim, hidden_dim), jnp.float32),
        "b1": jnp.zeros((1, hidden_dim), jnp.float32),
        "w2": init_std * jax.random.normal(k2, (hidden_dim, hidden_dim), jnp.float32),
        "b2": jnp.zeros((1, hidden_dim), jnp.float32),
        "w_mu": init_std * jax.random.normal(k3, (hidden_dim, action_dim), jnp.float32),
        "b_mu": jnp.zeros((1, action_dim), jnp.float32),
        "log_std": jnp.zeros((1, action_dim), jnp.float32),
        "w_c": init_std * jax.random.normal(k4, (hidden_dim, 1), jnp.float32),
        "b_c": jnp.zeros((1, 1), jnp.float32),
    }


def reference_forward(x, params, eps):
    """Pure-JAX reference (uses the un-simplified log_prob formula)."""
    h = jnp.maximum(x @ params["w1"] + params["b1"], 0.0)
    h = jnp.maximum(h @ params["w2"] + params["b2"], 0.0)
    mu = h @ params["w_mu"] + params["b_mu"]
    log_std = params["log_std"]
    std = jnp.exp(log_std)
    a_raw = mu + std * eps
    log_prob = (
        -((a_raw - mu) ** 2) / (2.0 * std * std)
        - log_std
        - math.log(math.sqrt(2.0 * math.pi))
    )
    action = jnp.tanh(a_raw)
    value = h @ params["w_c"] + params["b_c"]
    return action, value, log_prob


if __name__ == "__main__":
    input_dim = 5 + 1   # as in the reference script
    hidden_dim = 64
    action_dim = 4
    batch = 8

    key = jax.random.PRNGKey(0)
    k_param, k_x, k_eps = jax.random.split(key, 3)

    params = init_params(k_param, input_dim, hidden_dim, action_dim, init_std=0.02)
    x = jax.random.normal(k_x, (batch, input_dim), jnp.float32)
    eps = jax.random.normal(k_eps, (batch, action_dim), jnp.float32)

    action, value, log_prob = actor_critic_forward(x, params, eps)
    jax.block_until_ready((action, value, log_prob))

    # correctness check against pure-JAX reference
    a_ref, v_ref, lp_ref = reference_forward(x, params, eps)
    assert action.shape == (batch, action_dim)
    assert value.shape == (batch, 1)
    assert log_prob.shape == (batch, action_dim)
    assert jnp.allclose(action, a_ref, atol=1e-5), "action mismatch"
    assert jnp.allclose(value, v_ref, atol=1e-5), "value mismatch"
    assert jnp.allclose(log_prob, lp_ref, atol=1e-5), "log_prob mismatch"

    print("KERNEL_OK")
</pallas_src>

<mosaic_0001>
module attributes {stable_mosaic.version = 11 : i64} {
  func.func @actor_critic_kernel(%arg0: i32, %arg1: memref<8x128xf32, #tpu.memory_space<vmem>>, %arg2: memref<128x128xf32, #tpu.memory_space<vmem>>, %arg3: memref<128x128xf32, #tpu.memory_space<vmem>>, %arg4: memref<128x128xf32, #tpu.memory_space<vmem>>, %arg5: memref<8x128xf32, #tpu.memory_space<vmem>>, %arg6: memref<8x128xf32, #tpu.memory_space<vmem>>) attributes {dimension_semantics = [#tpu.dimension_semantics<parallel>], iteration_bounds = array<i64: 1>, scalar_prefetch = 0 : i64, scratch_operands = 0 : i64, tpu.core_type = #tpu.core_type<tc>, window_params = [{transform_indices = @transform_0, window_bounds = array<i64: 8, 128>}, {pipeline_mode = #tpu.pipeline_mode<synchronous>, transform_indices = @transform_1, window_bounds = array<i64: 128, 128>}, {pipeline_mode = #tpu.pipeline_mode<synchronous>, transform_indices = @transform_2, window_bounds = array<i64: 128, 128>}, {pipeline_mode = #tpu.pipeline_mode<synchronous>, transform_indices = @transform_3, window_bounds = array<i64: 128, 128>}, {pipeline_mode = #tpu.pipeline_mode<synchronous>, transform_indices = @transform_4, window_bounds = array<i64: 8, 128>}, {transform_indices = @transform_5, window_bounds = array<i64: 8, 128>}]} {
    %c0 = arith.constant 0 : index
    %c0_0 = arith.constant 0 : index
    %0 = vector.load %arg1[%c0, %c0_0] : memref<8x128xf32, #tpu.memory_space<vmem>>, vector<8x128xf32>
    %c0_1 = arith.constant 0 : index
    %c0_2 = arith.constant 0 : index
    %1 = vector.load %arg5[%c0_1, %c0_2] : memref<8x128xf32, #tpu.memory_space<vmem>>, vector<8x128xf32>
    %2 = vector.extract_strided_slice %1 {offsets = [0, 0], sizes = [1, 128], strides = [1, 1]} : vector<8x128xf32> to vector<1x128xf32>
    %3 = vector.extract_strided_slice %1 {offsets = [1, 0], sizes = [1, 128], strides = [1, 1]} : vector<8x128xf32> to vector<1x128xf32>
    %4 = vector.extract_strided_slice %1 {offsets = [2, 0], sizes = [1, 128], strides = [1, 1]} : vector<8x128xf32> to vector<1x128xf32>
    %5 = vector.extract_strided_slice %1 {offsets = [3, 0], sizes = [1, 128], strides = [1, 1]} : vector<8x128xf32> to vector<1x128xf32>
    %c0_3 = arith.constant 0 : index
    %c0_4 = arith.constant 0 : index
    %6 = vector.load %arg2[%c0_3, %c0_4] : memref<128x128xf32, #tpu.memory_space<vmem>>, vector<128x128xf32>
    %cst = arith.constant dense<0.000000e+00> : vector<8x128xf32>
    %7 = tpu.matmul %0, %6, %cst {dimension_numbers = #tpu.dot_dimension_numbers<[1], [0], [0], [1], [0, 0, 1, 1], [], []>} : vector<8x128xf32>, vector<128x128xf32>, vector<8x128xf32> -> vector<8x128xf32>
    %cst_5 = arith.constant 0.000000e+00 : f32
    %8 = vector.broadcast %cst_5 : f32 to vector<8x128xf32>
    %9 = arith.maximumf %7, %8 : vector<8x128xf32>
    %c0_6 = arith.constant 0 : index
    %c0_7 = arith.constant 0 : index
    %10 = vector.load %arg3[%c0_6, %c0_7] : memref<128x128xf32, #tpu.memory_space<vmem>>, vector<128x128xf32>
    %cst_8 = arith.constant dense<0.000000e+00> : vector<8x128xf32>
    %11 = tpu.matmul %9, %10, %cst_8 {dimension_numbers = #tpu.dot_dimension_numbers<[1], [0], [0], [1], [0, 0, 1, 1], [], []>} : vector<8x128xf32>, vector<128x128xf32>, vector<8x128xf32> -> vector<8x128xf32>
    %12 = vector.broadcast %2 : vector<1x128xf32> to vector<8x128xf32>
    %13 = arith.addf %11, %12 : vector<8x128xf32>
    %cst_9 = arith.constant 0.000000e+00 : f32
    %14 = vector.broadcast %cst_9 : f32 to vector<8x128xf32>
    %15 = arith.maximumf %13, %14 : vector<8x128xf32>
    %c0_10 = arith.constant 0 : index
    %c0_11 = arith.constant 0 : index
    %16 = vector.load %arg4[%c0_10, %c0_11] : memref<128x128xf32, #tpu.memory_space<vmem>>, vector<128x128xf32>
    %cst_12 = arith.constant dense<0.000000e+00> : vector<8x128xf32>
    %17 = tpu.matmul %15, %16, %cst_12 {dimension_numbers = #tpu.dot_dimension_numbers<[1], [0], [0], [1], [0, 0, 1, 1], [], []>} : vector<8x128xf32>, vector<128x128xf32>, vector<8x128xf32> -> vector<8x128xf32>
    %18 = vector.broadcast %3 : vector<1x128xf32> to vector<8x128xf32>
    %19 = arith.addf %17, %18 : vector<8x128xf32>
    %20 = vector.broadcast %4 : vector<1x128xf32> to vector<8x128xf32>
    %21 = arith.mulf %20, %0 : vector<8x128xf32>
    %22 = arith.addf %19, %21 : vector<8x128xf32>
    %23 = math.tanh %22 : vector<8x128xf32>
    %cst_13 = arith.constant -5.000000e-01 : f32
    %24 = vector.broadcast %cst_13 : f32 to vector<8x128xf32>
    %25 = arith.mulf %24, %0 : vector<8x128xf32>
    %26 = arith.mulf %25, %0 : vector<8x128xf32>
    %27 = vector.broadcast %5 : vector<1x128xf32> to vector<8x128xf32>
    %28 = arith.addf %26, %27 : vector<8x128xf32>
    %29 = tpu.iota {dimensions = array<i32: 1>} : vector<8x128xi32>
    %c4_i32 = arith.constant 4 : i32
    %30 = vector.broadcast %c4_i32 : i32 to vector<8x128xi32>
    %31 = arith.cmpi slt, %29, %30 : vector<8x128xi32>
    %c8_i32 = arith.constant 8 : i32
    %32 = vector.broadcast %c8_i32 : i32 to vector<8x128xi32>
    %33 = arith.cmpi slt, %29, %32 : vector<8x128xi32>
    %c8_i32_14 = arith.constant 8 : i32
    %34 = vector.broadcast %c8_i32_14 : i32 to vector<8x128xi32>
    %35 = arith.cmpi eq, %29, %34 : vector<8x128xi32>
    %cst_15 = arith.constant 0.000000e+00 : f32
    %36 = vector.broadcast %cst_15 : f32 to vector<8x128xf32>
    %37 = arith.select %35, %19, %36 : vector<8x128xi1>, vector<8x128xf32>
    %38 = arith.select %33, %28, %37 : vector<8x128xi1>, vector<8x128xf32>
    %39 = arith.select %31, %23, %38 : vector<8x128xi1>, vector<8x128xf32>
    %c0_16 = arith.constant 0 : index
    %c0_17 = arith.constant 0 : index
    %40 = vector.load %arg6[%c0_16, %c0_17] : memref<8x128xf32, #tpu.memory_space<vmem>>, vector<8x128xf32>
    tpu.vector_store %arg6[%c0_16, %c0_17], %39 {strides = array<i32>} : memref<8x128xf32, #tpu.memory_space<vmem>>, vector<8x128xf32>,
    return
  }
  func.func @transform_0(%arg0: i32) -> (i32, i32) {
    %c0_i32 = arith.constant 0 : i32
    %c0_i32_0 = arith.constant 0 : i32
    return %arg0, %c0_i32 : i32, i32
  }
  func.func @transform_1(%arg0: i32) -> (i32, i32) {
    %c0_i32 = arith.constant 0 : i32
    %c0_i32_0 = arith.constant 0 : i32
    %c0_i32_1 = arith.constant 0 : i32
    return %c0_i32, %c0_i32_0 : i32, i32
  }
  func.func @transform_2(%arg0: i32) -> (i32, i32) {
    %c0_i32 = arith.constant 0 : i32
    %c0_i32_0 = arith.constant 0 : i32
    %c0_i32_1 = arith.constant 0 : i32
    return %c0_i32, %c0_i32_0 : i32, i32
  }
  func.func @transform_3(%arg0: i32) -> (i32, i32) {
    %c0_i32 = arith.constant 0 : i32
    %c0_i32_0 = arith.constant 0 : i32
    %c0_i32_1 = arith.constant 0 : i32
    return %c0_i32, %c0_i32_0 : i32, i32
  }
  func.func @transform_4(%arg0: i32) -> (i32, i32) {
    %c0_i32 = arith.constant 0 : i32
    %c0_i32_0 = arith.constant 0 : i32
    %c0_i32_1 = arith.constant 0 : i32
    return %c0_i32, %c0_i32_0 : i32, i32
  }
  func.func @transform_5(%arg0: i32) -> (i32, i32) {
    %c0_i32 = arith.constant 0 : i32
    %c0_i32_0 = arith.constant 0 : i32
    return %arg0, %c0_i32 : i32, i32
  }
}

</mosaic_0001>

<llo_original>
// kernel: tpu_custom_call.1
$region0: #{tpu_custom_call.1}
  #allocation0 [shape = 'u32[]', space=smem, size = 0x4, offset = 0x4, fixed_abs, tag = 'smem constant byte address 0x4 - core index']
  #allocation1 [shape = 'u32[144,128]{1,0:T(1,128)}', space=vmem, size = 0x12000, scoped, tag = 'internal scratch']
  %s0 = inlined_call_operand.hbm [shape: f32[8,128], index: 0, kind: input, shape index: {}]
  %s1 = inlined_call_operand.hbm [shape: f32[128,128], index: 1, kind: input, shape index: {}]
  %s2 = inlined_call_operand.hbm [shape: f32[128,128], index: 2, kind: input, shape index: {}]
  %s3 = inlined_call_operand.hbm [shape: f32[128,128], index: 3, kind: input, shape index: {}]
  %s4 = inlined_call_operand.vmem [shape: f32[8,128], index: 4, kind: input, shape index: {}]
  %s5 = inlined_call_operand.hbm [shape: f32[8,128], index: 5, kind: output, shape index: {}]
  %s6 = sld [smem:[#allocation0]]
  $region46: #{tpu_custom_call.1} parent=0
    _
  %s8 = ssub.s32 1, %s6
  %s9 = scalar_select 0, %s8, %s6
  $region1: #{tpu_custom_call.1} parent=0
    #allocation2 [shape = 'u8[4096]{0}', space=vmem, size = 0x1000, scoped, tag = 'input window, operand 0, single buffered']
    #allocation3 [shape = 's32[1]{0}', space=sflag, size = 0x4, scoped, tag = 'scoped memory for tpu_custom_call.1']
    #allocation4 [shape = 's32[1]{0}', space=sflag, size = 0x4, scoped, tag = 'scoped memory for tpu_custom_call.1']
    #allocation5 [shape = 'u8[65536]{0}', space=vmem, size = 0x10000, scoped, tag = 'input window, operand 1, single buffered']
    #allocation6 [shape = 's32[1]{0}', space=sflag, size = 0x4, scoped, tag = 'scoped memory for tpu_custom_call.1']
    #allocation7 [shape = 'u8[65536]{0}', space=vmem, size = 0x10000, scoped, tag = 'input window, operand 2, single buffered']
    #allocation8 [shape = 'u8[65536]{0}', space=vmem, size = 0x10000, scoped, tag = 'input window, operand 3, single buffered']
    #allocation9 [shape = 's32[1]{0}', space=sflag, size = 0x4, scoped, tag = 'scoped memory for tpu_custom_call.1']
    #allocation10 [shape = 'u8[4096]{0}', space=vmem, size = 0x1000, scoped, tag = 'output window, operand 0, single buffered']
    %10 = vsyncpa [#allocation3], 0
    %11 = vsyncpa [#allocation6], 0
    %12 = vsyncpa [#allocation9], 0
    %13 = vsyncpa [#allocation4], 0
    // Predicated region
    $region2: #{tpu_custom_call.1} parent=1 // pred_check
      _
    $region3: #{tpu_custom_call.1} parent=1 // pred_check_branch
      %15 = sbr.rel (0) target = $region5
    $region4: #{tpu_custom_call.1} parent=1 // pred_region
      %s17 = ssub.s32 128, 128
      %18 = vsyncadd [#allocation3], %s17
      %s20 = sshll.u32 [#allocation2], 4
      %s21 = int_to_ptr.vmem [resolvable:$true] %s20
      %23 = dma.hbm_to_vmem [thread:$0]  %s0, 128, %s21, [#allocation3]
    $region5: #{tpu_custom_call.1} parent=1 // pred_fallthru
      _
    // Predicated region
    $region6: #{tpu_custom_call.1} parent=1 // pred_check
      _
    $region7: #{tpu_custom_call.1} parent=1 // pred_check_branch
      %25 = sbr.rel (0) target = $region9
    $region8: #{tpu_custom_call.1} parent=1 // pred_region
      %s27 = ssub.s32 2048, 2048
      %28 = vsyncadd [#allocation6], %s27
      %s29 = sshll.u32 [#allocation5], 4
      %s30 = int_to_ptr.vmem [resolvable:$true] %s29
      %35 = dma.hbm_to_vmem [thread:$0]  %s1, 2048, %s30, [#allocation6], 128, 128, 8
    $region9: #{tpu_custom_call.1} parent=1 // pred_fallthru
      _
    // Predicated region
    $region10: #{tpu_custom_call.1} parent=1 // pred_check
      _
    $region11: #{tpu_custom_call.1} parent=1 // pred_check_branch
      %37 = sbr.rel (0) target = $region13
    $region12: #{tpu_custom_call.1} parent=1 // pred_region
      %s39 = ssub.s32 2048, 2048
      %40 = vsyncadd [#allocation6], %s39
      %s41 = sshll.u32 [#allocation7], 4
      %s42 = int_to_ptr.vmem [resolvable:$true] %s41
      %47 = dma.hbm_to_vmem [thread:$0]  %s2, 2048, %s42, [#allocation6], 128, 128, 8
    $region13: #{tpu_custom_call.1} parent=1 // pred_fallthru
      _
    // Predicated region
    $region14: #{tpu_custom_call.1} parent=1 // pred_check
      _
    $region15: #{tpu_custom_call.1} parent=1 // pred_check_branch
      %49 = sbr.rel (0) target = $region17
    $region16: #{tpu_custom_call.1} parent=1 // pred_region
      %s51 = ssub.s32 2048, 2048
      %52 = vsyncadd [#allocation9], %s51
      %s53 = sshll.u32 [#allocation8], 4
      %s54 = int_to_ptr.vmem [resolvable:$true] %s53
      %59 = dma.hbm_to_vmem [thread:$0]  %s3, 2048, %s54, [#allocation9], 128, 128, 8
    $region17: #{tpu_custom_call.1} parent=1 // pred_fallthru
      _
    // Predicated region
    $region18: #{tpu_custom_call.1} parent=1 // pred_check
      _
    $region19: #{tpu_custom_call.1} parent=1 // pred_check_branch
      %61 = sbr.rel (0) target = $region21
    $region20: #{tpu_custom_call.1} parent=1 // pred_region
      _
    $region21: #{tpu_custom_call.1} parent=1 // pred_fallthru
      _
    // Predicated region
    $region22: #{tpu_custom_call.1} parent=1 // pred_check
      _
    $region23: #{tpu_custom_call.1} parent=1 // pred_check_branch
      %63 = sbr.rel (0) target = $region25
    $region24: #{tpu_custom_call.1} parent=1 // pred_region
      %64 = dma.done [#allocation3], 128
    $region25: #{tpu_custom_call.1} parent=1 // pred_fallthru
      _
    // Predicated region
    $region26: #{tpu_custom_call.1} parent=1 // pred_check
      _
    $region27: #{tpu_custom_call.1} parent=1 // pred_check_branch
      %66 = sbr.rel (0) target = $region29
    $region28: #{tpu_custom_call.1} parent=1 // pred_region
      %67 = dma.done [#allocation6], 2048
    $region29: #{tpu_custom_call.1} parent=1 // pred_fallthru
      _
    // Predicated region
    $region30: #{tpu_custom_call.1} parent=1 // pred_check
      _
    $region31: #{tpu_custom_call.1} parent=1 // pred_check_branch
      %69 = sbr.rel (0) target = $region33
    $region32: #{tpu_custom_call.1} parent=1 // pred_region
      %70 = dma.done [#allocation6], 2048
    $region33: #{tpu_custom_call.1} parent=1 // pred_fallthru
      _
    // Predicated region
    $region34: #{tpu_custom_call.1} parent=1 // pred_check
      _
    $region35: #{tpu_custom_call.1} parent=1 // pred_check_branch
      %72 = sbr.rel (0) target = $region37
    $region36: #{tpu_custom_call.1} parent=1 // pred_region
      %73 = dma.done [#allocation9], 2048
    $region37: #{tpu_custom_call.1} parent=1 // pred_fallthru
      _
    %v74 = vld [vmem:[#allocation2] sm:$0xff]
    %v75 = vld [vmem:[%s4] sm:$0xff]
    %v76 = vld [vmem:[#allocation5] sm:$0xff]
    %v77 = vld [vmem:[#allocation5 + $0x8] sm:$0xff]
    %v78 = vld [vmem:[#allocation5 + $0x10] sm:$0xff]
    %v79 = vld [vmem:[#allocation5 + $0x18] sm:$0xff]
    %v80 = vld [vmem:[#allocation5 + $0x20] sm:$0xff]
    %v81 = vld [vmem:[#allocation5 + $0x28] sm:$0xff]
    %v82 = vld [vmem:[#allocation5 + $0x30] sm:$0xff]
    %v83 = vld [vmem:[#allocation5 + $0x38] sm:$0xff]
    %v84 = vld [vmem:[#allocation5 + $0x40] sm:$0xff]
    %v85 = vld [vmem:[#allocation5 + $0x48] sm:$0xff]
    %v86 = vld [vmem:[#allocation5 + $0x50] sm:$0xff]
    %v87 = vld [vmem:[#allocation5 + $0x58] sm:$0xff]
    %v88 = vld [vmem:[#allocation5 + $0x60] sm:$0xff]
    %v89 = vld [vmem:[#allocation5 + $0x68] sm:$0xff]
    %v90 = vld [vmem:[#allocation5 + $0x70] sm:$0xff]
    %v91 = vld [vmem:[#allocation5 + $0x78] sm:$0xff]
    %92 = vmatprep.subr.mxu0 0.0
    %93 = vmatpush1.msra.mxu0 %v76
    %94 = vmatprep.subr.mxu0 0.0
    %95 = vmatpush1.msra.mxu0 %v77
    %96 = vmatprep.subr.mxu0 0.0
    %97 = vmatpush1.msra.mxu0 %v78
    %98 = vmatprep.subr.mxu0 0.0
    %99 = vmatpush1.msra.mxu0 %v79
    %100 = vmatprep.subr.mxu0 0.0
    %101 = vmatpush1.msra.mxu0 %v80
    %102 = vmatprep.subr.mxu0 0.0
    %103 = vmatpush1.msra.mxu0 %v81
    %104 = vmatprep.subr.mxu0 0.0
    %105 = vmatpush1.msra.mxu0 %v82
    %106 = vmatprep.subr.mxu0 0.0
    %107 = vmatpush1.msra.mxu0 %v83
    %108 = vmatprep.subr.mxu0 0.0
    %109 = vmatpush1.msra.mxu0 %v84
    %110 = vmatprep.subr.mxu0 0.0
    %111 = vmatpush1.msra.mxu0 %v85
    %112 = vmatprep.subr.mxu0 0.0
    %113 = vmatpush1.msra.mxu0 %v86
    %114 = vmatprep.subr.mxu0 0.0
    %115 = vmatpush1.msra.mxu0 %v87
    %116 = vmatprep.subr.mxu0 0.0
    %117 = vmatpush1.msra.mxu0 %v88
    %118 = vmatprep.subr.mxu0 0.0
    %119 = vmatpush1.msra.mxu0 %v89
    %120 = vmatprep.subr.mxu0 0.0
    %121 = vmatpush1.msra.mxu0 %v90
    %122 = vmatprep.subr.mxu0 0.0
    %123 = vmatpush1.msra.mxu0 %v91
    %124 = vmatprep.subr.mxu0 0.0
    %125 = vmatpush1.msra.mxu0 0.0
    %126 = vmatprep.subr.mxu0 0.0
    %127 = vmatpush1.msra.mxu0 0.0
    %128 = vmatprep.subr.mxu0 0.0
    %129 = vmatpush1.msra.mxu0 0.0
    %130 = vmatprep.subr.mxu0 0.0
    %131 = vmatpush1.msra.mxu0 0.0
    %132 = vmatprep.subr.mxu0 0.0
    %133 = vmatpush1.msra.mxu0 0.0
    %134 = vmatprep.subr.mxu0 0.0
    %135 = vmatpush1.msra.mxu0 0.0
    %136 = vmatprep.subr.mxu0 0.0
    %137 = vmatpush1.msra.mxu0 0.0
    %138 = vmatprep.subr.mxu0 0.0
    %139 = vmatpush1.msra.mxu0 0.0
    %140 = vmatprep.subr.mxu0 0.0
    %141 = vmatpush1.msra.mxu0 0.0
    %142 = vmatprep.subr.mxu0 0.0
    %143 = vmatpush1.msra.mxu0 0.0
    %144 = vmatprep.subr.mxu0 0.0
    %145 = vmatpush1.msra.mxu0 0.0
    %146 = vmatprep.subr.mxu0 0.0
    %147 = vmatpush1.msra.mxu0 0.0
    %148 = vmatprep.subr.mxu0 0.0
    %149 = vmatpush1.msra.mxu0 0.0
    %150 = vmatprep.subr.mxu0 0.0
    %151 = vmatpush1.msra.mxu0 0.0
    %152 = vmatprep.subr.mxu0 0.0
    %153 = vmatpush1.msra.mxu0 0.0
    %154 = vmatprep.subr.mxu0 0.0
    %155 = vmatpush1.msra.mxu0 0.0
    %156 = vmatprep.mubr.f32.mxu0 0.0
    %157 = vmatmul.mubr.f32.gmra.mrb[0].mxu0 %v74
    %v158 = vpop.f32.mrb[0].mxu0
    %v159 = vadd.f32 0.0, %v158
    %v160 = vpop.f32.mrb[0].mxu0
    %161 = vdwg.mxu0
    %v162 = vmax.f32 %v159, 0.0
    %v163 = vld [vmem:[#allocation7] sm:$0xff]
    %v164 = vld [vmem:[#allocation7 + $0x8] sm:$0xff]
    %v165 = vld [vmem:[#allocation7 + $0x10] sm:$0xff]
    %v166 = vld [vmem:[#allocation7 + $0x18] sm:$0xff]
    %v167 = vld [vmem:[#allocation7 + $0x20] sm:$0xff]
    %v168 = vld [vmem:[#allocation7 + $0x28] sm:$0xff]
    %v169 = vld [vmem:[#allocation7 + $0x30] sm:$0xff]
    %v170 = vld [vmem:[#allocation7 + $0x38] sm:$0xff]
    %v171 = vld [vmem:[#allocation7 + $0x40] sm:$0xff]
    %v172 = vld [vmem:[#allocation7 + $0x48] sm:$0xff]
    %v173 = vld [vmem:[#allocation7 + $0x50] sm:$0xff]
    %v174 = vld [vmem:[#allocation7 + $0x58] sm:$0xff]
    %v175 = vld [vmem:[#allocation7 + $0x60] sm:$0xff]
    %v176 = vld [vmem:[#allocation7 + $0x68] sm:$0xff]
    %v177 = vld [vmem:[#allocation7 + $0x70] sm:$0xff]
    %v178 = vld [vmem:[#allocation7 + $0x78] sm:$0xff]
    %v179 = vlaneseq
    %v180 = vshrl.u32 %v179, 7
    %v181 = vsub.s32 0, %v180
    %v182 = vrot.slane %v75, %v181
    %183 = vmatprep.subr.mxu0 0.0
    %184 = vmatpush1.msra.mxu0 %v163
    %185 = vmatprep.subr.mxu0 0.0
    %186 = vmatpush1.msra.mxu0 %v164
    %187 = vmatprep.subr.mxu0 0.0
    %188 = vmatpush1.msra.mxu0 %v165
    %189 = vmatprep.subr.mxu0 0.0
    %190 = vmatpush1.msra.mxu0 %v166
    %191 = vmatprep.subr.mxu0 0.0
    %192 = vmatpush1.msra.mxu0 %v167
    %193 = vmatprep.subr.mxu0 0.0
    %194 = vmatpush1.msra.mxu0 %v168
    %195 = vmatprep.subr.mxu0 0.0
    %196 = vmatpush1.msra.mxu0 %v169
    %197 = vmatprep.subr.mxu0 0.0
    %198 = vmatpush1.msra.mxu0 %v170
    %199 = vmatprep.subr.mxu0 0.0
    %200 = vmatpush1.msra.mxu0 %v171
    %201 = vmatprep.subr.mxu0 0.0
    %202 = vmatpush1.msra.mxu0 %v172
    %203 = vmatprep.subr.mxu0 0.0
    %204 = vmatpush1.msra.mxu0 %v173
    %205 = vmatprep.subr.mxu0 0.0
    %206 = vmatpush1.msra.mxu0 %v174
    %207 = vmatprep.subr.mxu0 0.0
    %208 = vmatpush1.msra.mxu0 %v175
    %209 = vmatprep.subr.mxu0 0.0
    %210 = vmatpush1.msra.mxu0 %v176
    %211 = vmatprep.subr.mxu0 0.0
    %212 = vmatpush1.msra.mxu0 %v177
    %213 = vmatprep.subr.mxu0 0.0
    %214 = vmatpush1.msra.mxu0 %v178
    %215 = vmatprep.subr.mxu0 0.0
    %216 = vmatpush1.msra.mxu0 0.0
    %217 = vmatprep.subr.mxu0 0.0
    %218 = vmatpush1.msra.mxu0 0.0
    %219 = vmatprep.subr.mxu0 0.0
    %220 = vmatpush1.msra.mxu0 0.0
    %221 = vmatprep.subr.mxu0 0.0
    %222 = vmatpush1.msra.mxu0 0.0
    %223 = vmatprep.subr.mxu0 0.0
    %224 = vmatpush1.msra.mxu0 0.0
    %225 = vmatprep.subr.mxu0 0.0
    %226 = vmatpush1.msra.mxu0 0.0
    %227 = vmatprep.subr.mxu0 0.0
    %228 = vmatpush1.msra.mxu0 0.0
    %229 = vmatprep.subr.mxu0 0.0
    %230 = vmatpush1.msra.mxu0 0.0
    %231 = vmatprep.subr.mxu0 0.0
    %232 = vmatpush1.msra.mxu0 0.0
    %233 = vmatprep.subr.mxu0 0.0
    %234 = vmatpush1.msra.mxu0 0.0
    %235 = vmatprep.subr.mxu0 0.0
    %236 = vmatpush1.msra.mxu0 0.0
    %237 = vmatprep.subr.mxu0 0.0
    %238 = vmatpush1.msra.mxu0 0.0
    %239 = vmatprep.subr.mxu0 0.0
    %240 = vmatpush1.msra.mxu0 0.0
    %241 = vmatprep.subr.mxu0 0.0
    %242 = vmatpush1.msra.mxu0 0.0
    %243 = vmatprep.subr.mxu0 0.0
    %244 = vmatpush1.msra.mxu0 0.0
    %245 = vmatprep.subr.mxu0 0.0
    %246 = vmatpush1.msra.mxu0 0.0
    %247 = vmatprep.mubr.f32.mxu0 0.0
    %248 = vmatmul.mubr.f32.gmra.mrb[0].mxu0 %v162
    %v249 = vpop.f32.mrb[0].mxu0
    %v250 = vadd.f32 %v182, %v249
    %v251 = vpop.f32.mrb[0].mxu0
    %252 = vdwg.mxu0
    %v253 = vmax.f32 %v250, 0.0
    %v254 = vld [vmem:[#allocation8] sm:$0xff]
    %v255 = vld [vmem:[#allocation8 + $0x8] sm:$0xff]
    %v256 = vld [vmem:[#allocation8 + $0x10] sm:$0xff]
    %v257 = vld [vmem:[#allocation8 + $0x18] sm:$0xff]
    %v258 = vld [vmem:[#allocation8 + $0x20] sm:$0xff]
    %v259 = vld [vmem:[#allocation8 + $0x28] sm:$0xff]
    %v260 = vld [vmem:[#allocation8 + $0x30] sm:$0xff]
    %v261 = vld [vmem:[#allocation8 + $0x38] sm:$0xff]
    %v262 = vld [vmem:[#allocation8 + $0x40] sm:$0xff]
    %v263 = vld [vmem:[#allocation8 + $0x48] sm:$0xff]
    %v264 = vld [vmem:[#allocation8 + $0x50] sm:$0xff]
    %v265 = vld [vmem:[#allocation8 + $0x58] sm:$0xff]
    %v266 = vld [vmem:[#allocation8 + $0x60] sm:$0xff]
    %v267 = vld [vmem:[#allocation8 + $0x68] sm:$0xff]
    %v268 = vld [vmem:[#allocation8 + $0x70] sm:$0xff]
    %v269 = vld [vmem:[#allocation8 + $0x78] sm:$0xff]
    %v270 = vlaneseq
    %v271 = vshrl.u32 %v270, 7
    %v272 = vsub.s32 1, %v271
    %v273 = vrot.slane %v75, %v272
    %274 = vmatprep.subr.mxu0 0.0
    %275 = vmatpush1.msra.mxu0 %v254
    %276 = vmatprep.subr.mxu0 0.0
    %277 = vmatpush1.msra.mxu0 %v255
    %278 = vmatprep.subr.mxu0 0.0
    %279 = vmatpush1.msra.mxu0 %v256
    %280 = vmatprep.subr.mxu0 0.0
    %281 = vmatpush1.msra.mxu0 %v257
    %282 = vmatprep.subr.mxu0 0.0
    %283 = vmatpush1.msra.mxu0 %v258
    %284 = vmatprep.subr.mxu0 0.0
    %285 = vmatpush1.msra.mxu0 %v259
    %286 = vmatprep.subr.mxu0 0.0
    %287 = vmatpush1.msra.mxu0 %v260
    %288 = vmatprep.subr.mxu0 0.0
    %289 = vmatpush1.msra.mxu0 %v261
    %290 = vmatprep.subr.mxu0 0.0
    %291 = vmatpush1.msra.mxu0 %v262
    %292 = vmatprep.subr.mxu0 0.0
    %293 = vmatpush1.msra.mxu0 %v263
    %294 = vmatprep.subr.mxu0 0.0
    %295 = vmatpush1.msra.mxu0 %v264
    %296 = vmatprep.subr.mxu0 0.0
    %297 = vmatpush1.msra.mxu0 %v265
    %298 = vmatprep.subr.mxu0 0.0
    %299 = vmatpush1.msra.mxu0 %v266
    %300 = vmatprep.subr.mxu0 0.0
    %301 = vmatpush1.msra.mxu0 %v267
    %302 = vmatprep.subr.mxu0 0.0
    %303 = vmatpush1.msra.mxu0 %v268
    %304 = vmatprep.subr.mxu0 0.0
    %305 = vmatpush1.msra.mxu0 %v269
    %306 = vmatprep.subr.mxu0 0.0
    %307 = vmatpush1.msra.mxu0 0.0
    %308 = vmatprep.subr.mxu0 0.0
    %309 = vmatpush1.msra.mxu0 0.0
    %310 = vmatprep.subr.mxu0 0.0
    %311 = vmatpush1.msra.mxu0 0.0
    %312 = vmatprep.subr.mxu0 0.0
    %313 = vmatpush1.msra.mxu0 0.0
    %314 = vmatprep.subr.mxu0 0.0
    %315 = vmatpush1.msra.mxu0 0.0
    %316 = vmatprep.subr.mxu0 0.0
    %317 = vmatpush1.msra.mxu0 0.0
    %318 = vmatprep.subr.mxu0 0.0
    %319 = vmatpush1.msra.mxu0 0.0
    %320 = vmatprep.subr.mxu0 0.0
    %321 = vmatpush1.msra.mxu0 0.0
    %322 = vmatprep.subr.mxu0 0.0
    %323 = vmatpush1.msra.mxu0 0.0
    %324 = vmatprep.subr.mxu0 0.0
    %325 = vmatpush1.msra.mxu0 0.0
    %326 = vmatprep.subr.mxu0 0.0
    %327 = vmatpush1.msra.mxu0 0.0
    %328 = vmatprep.subr.mxu0 0.0
    %329 = vmatpush1.msra.mxu0 0.0
    %330 = vmatprep.subr.mxu0 0.0
    %331 = vmatpush1.msra.mxu0 0.0
    %332 = vmatprep.subr.mxu0 0.0
    %333 = vmatpush1.msra.mxu0 0.0
    %334 = vmatprep.subr.mxu0 0.0
    %335 = vmatpush1.msra.mxu0 0.0
    %336 = vmatprep.subr.mxu0 0.0
    %337 = vmatpush1.msra.mxu0 0.0
    %338 = vmatprep.mubr.f32.mxu0 0.0
    %339 = vmatmul.mubr.f32.gmra.mrb[0].mxu0 %v253
    %v340 = vpop.f32.mrb[0].mxu0
    %v341 = vadd.f32 %v273, %v340
    %v342 = vpop.f32.mrb[0].mxu0
    %343 = vdwg.mxu0
    %v344 = vlaneseq
    %v345 = vshrl.u32 %v344, 7
    %v346 = vsub.s32 2, %v345
    %v347 = vrot.slane %v75, %v346
    %v348 = vmul.f32 %v347, %v74
    %v349 = vadd.f32 %v341, %v348
    %v350 = vtanh.pop %v349
    %v351 = vmul.f32 %v74, -0.5
    %v352 = vmul.f32 %v351, %v74
    %v353 = vlaneseq
    %v354 = vshrl.u32 %v353, 7
    %v355 = vsub.s32 3, %v354
    %v356 = vrot.slane %v75, %v355
    %v357 = vadd.f32 %v352, %v356
    %v358 = vlaneseq
    %v359 = vand.u32 %v358, 127
    %vm360 = vcmp.lt.s32.totalorder %v359, 4
    %vm361 = vcmp.lt.s32.totalorder %v359, 8
    %vm362 = vcmp.eq.s32.totalorder %v359, 8
    %v363 = vsel %vm362, %v341, 0.0
    %v364 = vsel %vm361, %v357, %v363
    %v365 = vsel %vm360, %v350, %v364
    %366 = vst [vmem:[#allocation10] sm:$0xff] %v365
    // Predicated region
    $region38: #{tpu_custom_call.1} parent=1 // pred_check
      _
    $region39: #{tpu_custom_call.1} parent=1 // pred_check_branch
      %368 = sbr.rel (0) target = $region41
    $region40: #{tpu_custom_call.1} parent=1 // pred_region
      %s370 = ssub.s32 128, 128
      %371 = vsyncadd [#allocation4], %s370
      %s373 = sshll.u32 [#allocation10], 4
      %s374 = int_to_ptr.vmem [resolvable:$true] %s373
      %376 = dma.vmem_to_hbm [thread:$0]  %s374, 128, %s5, [#allocation4]
    $region41: #{tpu_custom_call.1} parent=1 // pred_fallthru
      _
    // Predicated region
    $region42: #{tpu_custom_call.1} parent=1 // pred_check
      _
    $region43: #{tpu_custom_call.1} parent=1 // pred_check_branch
      %378 = sbr.rel (0) target = $region45
    $region44: #{tpu_custom_call.1} parent=1 // pred_region
      %379 = dma.done [#allocation4], 128
    $region45: #{tpu_custom_call.1} parent=1 // pred_fallthru
      _
    %380 = vsyncpa [#allocation3], 1
    %381 = vsyncpa [#allocation6], 1
    %382 = vsyncpa [#allocation9], 1
    %383 = vsyncpa [#allocation4], 1

</llo_original>
